<compile_context>
chip_gen: v6e
topology: v6e:2x2x1
jax: 0.10.0
libtpu: 0.0.40
codegen_flags: <defaults>
</compile_context>

<pallas_src>
import functools

import numpy as np
import jax
import jax.numpy as jnp
from jax.experimental import pallas as pl
from jax.experimental.pallas import tpu as pltpu


def _conv_t1d_relu_kernel(x_ref, w_ref, b_ref, o_ref, carry_ref, *,
                          T_L, K, C_out, stride, halo):
    """One (batch n, row-tile t) step of fused ConvTranspose1d + bias + ReLU.

    x_ref:     (T_L, C_in)            bf16   input rows m in [t*T_L, (t+1)*T_L)
    w_ref:     (C_in, K*C_out)        bf16   tap-major columns: col = k*C_out + co
    b_ref:     (1, C_out)             f32
    o_ref:     (T_L, stride*C_out)    bf16   row r = output block b = t*T_L + r,
                                             lane ph*C_out+co = pre-crop l' = b*stride+ph
    carry_ref: (max(halo,1), stride*C_out) f32  contributions spilling into the
                                             next tile's first `halo` blocks
    """
    t = pl.program_id(1)

    # One wide bf16 MXU matmul for all K taps at once (f32 accumulation).
    y = jnp.dot(x_ref[...], w_ref[...], preferred_element_type=jnp.float32)  # (T_L, K*C_out)

    bias = b_ref[...]                                    # (1, C_out) f32, hoisted once

    if halo > 0:
        @pl.when(t == 0)
        def _():                                         # new batch element: no carry yet
            carry_ref[...] = jnp.zeros_like(carry_ref)
        carry_in = carry_ref[...]                        # (halo, stride*C_out) f32

    zero = jnp.float32(0.0)
    for ph in range(stride):
        # Phase decomposition of the transposed-conv scatter:
        #   l' = m*stride + k  ->  phase = k % stride, block = m + k // stride.
        # Within a row tile the block shift j = k // stride is a small static
        # constant, so each tap is one lax.pad (sublane shift) + VPU add.
        acc = None
        for k in range(ph, K, stride):
            j = k // stride                              # static shift, 0 <= j <= halo
            y_k = y[:, k * C_out:(k + 1) * C_out]        # (T_L, C_out) lane slice
            shifted = jax.lax.pad(y_k, zero, ((j, halo - j, 0), (0, 0, 0)))
            acc = shifted if acc is None else acc + shifted
        if acc is None:                                  # stride > K: phase has no taps
            acc = jnp.zeros((T_L + halo, C_out), jnp.float32)

        main = acc[:T_L]                                 # blocks owned by this tile
        if halo > 0:
            # contributions spilling into the NEXT tile's first `halo` blocks
            carry_ref[:, ph * C_out:(ph + 1) * C_out] = acc[T_L:]
            # contributions carried over from the PREVIOUS tile
            cin = carry_in[:, ph * C_out:(ph + 1) * C_out]           # (halo, C_out)
            main = main + jax.lax.pad(cin, zero, ((0, T_L - halo, 0), (0, 0, 0)))

        # bias + ReLU epilogue; lane-aligned bf16 store at lane offset ph*C_out.
        o_ref[:, ph * C_out:(ph + 1) * C_out] = jnp.maximum(main + bias, 0.0).astype(o_ref.dtype)


def conv1d_transpose_relu(x_ncl, weight, bias, *, stride, padding, row_tile=256):
    """PyTorch-semantics ConvTranspose1d + ReLU via a Pallas TPU kernel.

    x_ncl:  (N, C_in, L_in)   -- PyTorch NCL layout
    weight: (C_in, C_out, K)  -- PyTorch ConvTranspose1d weight layout
    bias:   (C_out,)
    returns (N, C_out, L_out) with L_out = (L_in - 1)*stride - 2*padding + K
    """
    N, C_in, L_in = x_ncl.shape
    wc_in, C_out, K = weight.shape
    assert wc_in == C_in
    assert stride >= 1 and K >= 1
    L_out = (L_in - 1) * stride - 2 * padding + K
    assert L_out > 0

    halo = (K - 1) // stride                  # output-block halo between row tiles
    n_blocks = L_in + halo                    # pre-crop output blocks (stride positions each)

    # Row-tile size: multiple of 8 (sublane-aligned), >= halo, capped at what's needed.
    T_L = max(8, (min(row_tile, ((n_blocks + 7) // 8) * 8) // 8) * 8)
    assert halo <= T_L
    T = pl.cdiv(n_blocks, T_L)                # row tiles per batch element
    L_pad = T * T_L                           # padded input rows / output blocks per batch

    # ---- layout plumbing only (XLA side, cheap) ----
    x_nlc = jnp.transpose(x_ncl, (0, 2, 1))                          # (N, L_in, C_in)
    x_nlc = jnp.pad(x_nlc, ((0, 0), (0, L_pad - L_in), (0, 0)))
    x2d = x_nlc.reshape(N * L_pad, C_in).astype(jnp.bfloat16)
    # weight (C_in, C_out, K) -> (C_in, K, C_out) -> (C_in, K*C_out): tap-major columns
    w_fused = jnp.transpose(weight, (0, 2, 1)).reshape(C_in, K * C_out).astype(jnp.bfloat16)
    b2d = bias.reshape(1, C_out).astype(jnp.float32)

    kernel = functools.partial(
        _conv_t1d_relu_kernel, T_L=T_L, K=K, C_out=C_out, stride=stride, halo=halo)

    flops = 2 * N * L_pad * C_in * K * C_out
    bytes_accessed = (x2d.size * 2 + w_fused.size * 2 + b2d.size * 4
                      + N * L_pad * stride * C_out * 2)
    # Per-step VMEM working set (double-buffered operands + f32 Y + temps), with headroom;
    # never below v5e's 16 MiB scoped default, never above v7x-safe 48 MiB.
    step_bytes = (2 * T_L * C_in * 2 + 2 * C_in * K * C_out * 2 + 2 * C_out * 4
                  + 2 * T_L * stride * C_out * 2 + 4 * T_L * K * C_out * 4)
    vmem_limit = int(min(max(4 * step_bytes, 16 << 20), 48 << 20))

    out2d = pl.pallas_call(
        kernel,
        out_shape=jax.ShapeDtypeStruct((N * L_pad, stride * C_out), jnp.bfloat16),
        grid=(N, T),
        in_specs=[
            pl.BlockSpec((T_L, C_in), lambda n, t: (n * T + t, 0)),
            pl.BlockSpec((C_in, K * C_out), lambda n, t: (0, 0)),
            pl.BlockSpec((1, C_out), lambda n, t: (0, 0)),
        ],
        out_specs=pl.BlockSpec((T_L, stride * C_out), lambda n, t: (n * T + t, 0)),
        scratch_shapes=[pltpu.VMEM((max(halo, 1), stride * C_out), jnp.float32)],
        compiler_params=pltpu.CompilerParams(
            dimension_semantics=("parallel", "arbitrary"),
            vmem_limit_bytes=vmem_limit),
        cost_estimate=pl.CostEstimate(
            flops=flops, transcendentals=0, bytes_accessed=bytes_accessed),
    )(x2d, w_fused, b2d)

    # FREE reshape (phase-major lane layout interleaves straight into the sequence),
    # crop the transposed-conv padding, back to PyTorch NCL.  No de-interleave transpose.
    out_nlc = out2d.reshape(N, L_pad * stride, C_out)[:, padding:padding + L_out, :]
    return jnp.transpose(out_nlc, (0, 2, 1))


def _reference(x, w, b, stride, padding):
    """Independent numpy reference of ConvTranspose1d + ReLU (PyTorch semantics)."""
    N, C_in, L_in = x.shape
    _, C_out, K = w.shape
    L_out = (L_in - 1) * stride - 2 * padding + K
    out = np.zeros((N, C_out, L_out), np.float32)
    for k in range(K):
        for m in range(L_in):
            l = m * stride + k - padding
            if 0 <= l < L_out:
                out[:, :, l] += np.einsum("ni,io->no", x[:, :, m], w[:, :, k])
    out += b[None, :, None]
    return np.maximum(out, 0.0)


if __name__ == "__main__":
    # Small shapes consistent with the module (defaults use 512 channels; we use 128).
    N, C_in, C_out, L_in = 2, 128, 128, 16
    K, stride, padding = 5, 2, 0

    key = jax.random.PRNGKey(0)
    kx, kw, kb = jax.random.split(key, 3)

    x = jax.random.normal(kx, (N, C_in, L_in), dtype=jnp.float32)
    # deterministic, PyTorch-style uniform init for ConvTranspose1d params
    bound = 1.0 / np.sqrt(C_in * K)
    w = jax.random.uniform(kw, (C_in, C_out, K), jnp.float32, -bound, bound)
    b = jax.random.uniform(kb, (C_out,), jnp.float32, -bound, bound)

    ref = _reference(np.asarray(x), np.asarray(w), np.asarray(b), stride, padding)

    # Multi-tile path (row_tile=8 -> 3 row tiles per batch, exercises the halo carry).
    out_tiled = conv1d_transpose_relu(x, w, b, stride=stride, padding=padding, row_tile=8)
    out_tiled = jax.block_until_ready(out_tiled)
    np.testing.assert_allclose(np.asarray(out_tiled.astype(jnp.float32)), ref,
                               atol=2e-2, rtol=2e-2)

    # Default (single-tile at this small L_in) path.
    out_def = conv1d_transpose_relu(x, w, b, stride=stride, padding=padding)
    out_def = jax.block_until_ready(out_def)
    np.testing.assert_allclose(np.asarray(out_def.astype(jnp.float32)), ref,
                               atol=2e-2, rtol=2e-2)

    print("KERNEL_OK")
</pallas_src>

<mosaic_0001>
module attributes {stable_mosaic.version = 11 : i64} {
  func.func @_conv_t1d_relu_kernel(%arg0: i32, %arg1: i32, %arg2: memref<8x128xbf16, #tpu.memory_space<vmem>>, %arg3: memref<128x640xbf16, #tpu.memory_space<vmem>>, %arg4: memref<1x128xf32, #tpu.memory_space<vmem>>, %arg5: memref<8x256xbf16, #tpu.memory_space<vmem>>, %arg6: memref<2x256xf32, #tpu.memory_space<vmem>>) attributes {dimension_semantics = [#tpu.dimension_semantics<parallel>, #tpu.dimension_semantics<arbitrary>], iteration_bounds = array<i64: 2, 3>, scalar_prefetch = 0 : i64, scratch_operands = 1 : i64, tpu.core_type = #tpu.core_type<tc>, window_params = [{transform_indices = @transform_0, window_bounds = array<i64: 8, 128>}, {pipeline_mode = #tpu.pipeline_mode<synchronous>, transform_indices = @transform_1, window_bounds = array<i64: 128, 640>}, {pipeline_mode = #tpu.pipeline_mode<synchronous>, transform_indices = @transform_2, window_bounds = array<i64: 1, 128>}, {transform_indices = @transform_3, window_bounds = array<i64: 8, 256>}]} {
    %c0 = arith.constant 0 : index
    %c0_0 = arith.constant 0 : index
    %0 = vector.load %arg2[%c0, %c0_0] : memref<8x128xbf16, #tpu.memory_space<vmem>>, vector<8x128xbf16>
    %c0_1 = arith.constant 0 : index
    %c0_2 = arith.constant 0 : index
    %1 = vector.load %arg3[%c0_1, %c0_2] : memref<128x640xbf16, #tpu.memory_space<vmem>>, vector<128x640xbf16>
    %cst = arith.constant dense<0.000000e+00> : vector<8x640xf32>
    %2 = tpu.matmul %0, %1, %cst {dimension_numbers = #tpu.dot_dimension_numbers<[1], [0], [0], [1], [0, 0, 1, 1], [], []>} : vector<8x128xbf16>, vector<128x640xbf16>, vector<8x640xf32> -> vector<8x640xf32>
    %c0_3 = arith.constant 0 : index
    %c0_4 = arith.constant 0 : index
    %3 = vector.load %arg4[%c0_3, %c0_4] : memref<1x128xf32, #tpu.memory_space<vmem>>, vector<1x128xf32>
    %c0_i32 = arith.constant 0 : i32
    %4 = arith.cmpi eq, %arg1, %c0_i32 : i32
    %5 = arith.extui %4 : i1 to i32
    %c0_i32_5 = arith.constant 0 : i32
    %6 = arith.cmpi ne, %5, %c0_i32_5 : i32
    scf.if %6 {
      %cst_24 = arith.constant 0.000000e+00 : f32
      %56 = vector.broadcast %cst_24 : f32 to vector<2x256xf32>
      %c0_25 = arith.constant 0 : index
      %c0_26 = arith.constant 0 : index
      %57 = vector.load %arg6[%c0_25, %c0_26] : memref<2x256xf32, #tpu.memory_space<vmem>>, vector<2x256xf32>
      tpu.vector_store %arg6[%c0_25, %c0_26], %56 {strides = array<i32>} : memref<2x256xf32, #tpu.memory_space<vmem>>, vector<2x256xf32>,
    } else {
    }
    %c0_6 = arith.constant 0 : index
    %c0_7 = arith.constant 0 : index
    %7 = vector.load %arg6[%c0_6, %c0_7] : memref<2x256xf32, #tpu.memory_space<vmem>>, vector<2x256xf32>
    %8 = vector.extract_strided_slice %2 {offsets = [0, 0], sizes = [8, 128], strides = [1, 1]} : vector<8x640xf32> to vector<8x128xf32>
    %cst_8 = arith.constant 0.000000e+00 : f32
    %9 = vector.broadcast %cst_8 : f32 to vector<2x128xf32>
    %10 = tpu.concatenate %8, %9 in 0 : vector<8x128xf32>, vector<2x128xf32> -> vector<10x128xf32>
    %11 = vector.extract_strided_slice %2 {offsets = [0, 256], sizes = [8, 128], strides = [1, 1]} : vector<8x640xf32> to vector<8x128xf32>
    %cst_9 = arith.constant 0.000000e+00 : f32
    %12 = vector.broadcast %cst_9 : f32 to vector<1x128xf32>
    %13 = tpu.concatenate %12, %11 in 0 : vector<1x128xf32>, vector<8x128xf32> -> vector<9x128xf32>
    %14 = vector.broadcast %cst_9 : f32 to vector<1x128xf32>
    %15 = tpu.concatenate %13, %14 in 0 : vector<9x128xf32>, vector<1x128xf32> -> vector<10x128xf32>
    %16 = arith.addf %10, %15 : vector<10x128xf32>
    %17 = vector.extract_strided_slice %2 {offsets = [0, 512], sizes = [8, 128], strides = [1, 1]} : vector<8x640xf32> to vector<8x128xf32>
    %cst_10 = arith.constant 0.000000e+00 : f32
    %18 = vector.broadcast %cst_10 : f32 to vector<2x128xf32>
    %19 = tpu.concatenate %18, %17 in 0 : vector<2x128xf32>, vector<8x128xf32> -> vector<10x128xf32>
    %20 = arith.addf %16, %19 : vector<10x128xf32>
    %21 = vector.extract_strided_slice %20 {offsets = [0, 0], sizes = [8, 128], strides = [1, 1]} : vector<10x128xf32> to vector<8x128xf32>
    %22 = vector.extract_strided_slice %20 {offsets = [8, 0], sizes = [2, 128], strides = [1, 1]} : vector<10x128xf32> to vector<2x128xf32>
    %c0_11 = arith.constant 0 : index
    %c0_12 = arith.constant 0 : index
    %23 = vector.load %arg6[%c0_11, %c0_12] : memref<2x256xf32, #tpu.memory_space<vmem>>, vector<2x128xf32>
    tpu.vector_store %arg6[%c0_11, %c0_12], %22 {strides = array<i32>} : memref<2x256xf32, #tpu.memory_space<vmem>>, vector<2x128xf32>,
    %24 = vector.extract_strided_slice %7 {offsets = [0, 0], sizes = [2, 128], strides = [1, 1]} : vector<2x256xf32> to vector<2x128xf32>
    %cst_13 = arith.constant 0.000000e+00 : f32
    %25 = vector.broadcast %cst_13 : f32 to vector<6x128xf32>
    %26 = tpu.concatenate %24, %25 in 0 : vector<2x128xf32>, vector<6x128xf32> -> vector<8x128xf32>
    %27 = arith.addf %21, %26 : vector<8x128xf32>
    %28 = vector.broadcast %3 : vector<1x128xf32> to vector<8x128xf32>
    %29 = arith.addf %27, %28 : vector<8x128xf32>
    %cst_14 = arith.constant 0.000000e+00 : f32
    %30 = vector.broadcast %cst_14 : f32 to vector<8x128xf32>
    %31 = arith.maximumf %29, %30 : vector<8x128xf32>
    %32 = arith.truncf %31 : vector<8x128xf32> to vector<8x128xbf16>
    %c0_15 = arith.constant 0 : index
    %c0_16 = arith.constant 0 : index
    %33 = vector.load %arg5[%c0_15, %c0_16] : memref<8x256xbf16, #tpu.memory_space<vmem>>, vector<8x128xbf16>
    tpu.vector_store %arg5[%c0_15, %c0_16], %32 {strides = array<i32>} : memref<8x256xbf16, #tpu.memory_space<vmem>>, vector<8x128xbf16>,
    %34 = vector.extract_strided_slice %2 {offsets = [0, 128], sizes = [8, 128], strides = [1, 1]} : vector<8x640xf32> to vector<8x128xf32>
    %cst_17 = arith.constant 0.000000e+00 : f32
    %35 = vector.broadcast %cst_17 : f32 to vector<2x128xf32>
    %36 = tpu.concatenate %34, %35 in 0 : vector<8x128xf32>, vector<2x128xf32> -> vector<10x128xf32>
    %37 = vector.extract_strided_slice %2 {offsets = [0, 384], sizes = [8, 128], strides = [1, 1]} : vector<8x640xf32> to vector<8x128xf32>
    %cst_18 = arith.constant 0.000000e+00 : f32
    %38 = vector.broadcast %cst_18 : f32 to vector<1x128xf32>
    %39 = tpu.concatenate %38, %37 in 0 : vector<1x128xf32>, vector<8x128xf32> -> vector<9x128xf32>
    %40 = vector.broadcast %cst_18 : f32 to vector<1x128xf32>
    %41 = tpu.concatenate %39, %40 in 0 : vector<9x128xf32>, vector<1x128xf32> -> vector<10x128xf32>
    %42 = arith.addf %36, %41 : vector<10x128xf32>
    %43 = vector.extract_strided_slice %42 {offsets = [0, 0], sizes = [8, 128], strides = [1, 1]} : vector<10x128xf32> to vector<8x128xf32>
    %44 = vector.extract_strided_slice %42 {offsets = [8, 0], sizes = [2, 128], strides = [1, 1]} : vector<10x128xf32> to vector<2x128xf32>
    %c0_19 = arith.constant 0 : index
    %c128 = arith.constant 128 : index
    %45 = vector.load %arg6[%c0_19, %c128] : memref<2x256xf32, #tpu.memory_space<vmem>>, vector<2x128xf32>
    tpu.vector_store %arg6[%c0_19, %c128], %44 {strides = array<i32>} : memref<2x256xf32, #tpu.memory_space<vmem>>, vector<2x128xf32>,
    %46 = vector.extract_strided_slice %7 {offsets = [0, 128], sizes = [2, 128], strides = [1, 1]} : vector<2x256xf32> to vector<2x128xf32>
    %cst_20 = arith.constant 0.000000e+00 : f32
    %47 = vector.broadcast %cst_20 : f32 to vector<6x128xf32>
    %48 = tpu.concatenate %46, %47 in 0 : vector<2x128xf32>, vector<6x128xf32> -> vector<8x128xf32>
    %49 = arith.addf %43, %48 : vector<8x128xf32>
    %50 = vector.broadcast %3 : vector<1x128xf32> to vector<8x128xf32>
    %51 = arith.addf %49, %50 : vector<8x128xf32>
    %cst_21 = arith.constant 0.000000e+00 : f32
    %52 = vector.broadcast %cst_21 : f32 to vector<8x128xf32>
    %53 = arith.maximumf %51, %52 : vector<8x128xf32>
    %54 = arith.truncf %53 : vector<8x128xf32> to vector<8x128xbf16>
    %c0_22 = arith.constant 0 : index
    %c128_23 = arith.constant 128 : index
    %55 = vector.load %arg5[%c0_22, %c128_23] : memref<8x256xbf16, #tpu.memory_space<vmem>>, vector<8x128xbf16>
    tpu.vector_store %arg5[%c0_22, %c128_23], %54 {strides = array<i32>} : memref<8x256xbf16, #tpu.memory_space<vmem>>, vector<8x128xbf16>,
    return
  }
  func.func @transform_0(%arg0: i32, %arg1: i32) -> (i32, i32) {
    %c3_i32 = arith.constant 3 : i32
    %0 = arith.muli %arg0, %c3_i32 : i32
    %1 = arith.addi %0, %arg1 : i32
    %c0_i32 = arith.constant 0 : i32
    %c0_i32_0 = arith.constant 0 : i32
    return %1, %c0_i32 : i32, i32
  }
  func.func @transform_1(%arg0: i32, %arg1: i32) -> (i32, i32) {
    %c0_i32 = arith.constant 0 : i32
    %c0_i32_0 = arith.constant 0 : i32
    %c0_i32_1 = arith.constant 0 : i32
    return %c0_i32, %c0_i32_0 : i32, i32
  }
  func.func @transform_2(%arg0: i32, %arg1: i32) -> (i32, i32) {
    %c0_i32 = arith.constant 0 : i32
    %c0_i32_0 = arith.constant 0 : i32
    %c0_i32_1 = arith.constant 0 : i32
    return %c0_i32, %c0_i32_0 : i32, i32
  }
  func.func @transform_3(%arg0: i32, %arg1: i32) -> (i32, i32) {
    %c3_i32 = arith.constant 3 : i32
    %0 = arith.muli %arg0, %c3_i32 : i32
    %1 = arith.addi %0, %arg1 : i32
    %c0_i32 = arith.constant 0 : i32
    %c0_i32_0 = arith.constant 0 : i32
    return %1, %c0_i32 : i32, i32
  }
}

</mosaic_0001>

<llo_original>
// kernel: tpu_custom_call.1
$region0: #{tpu_custom_call.1}
  #allocation0 [shape = 'u32[]', space=smem, size = 0x4, offset = 0x4, fixed_abs, tag = 'smem constant byte address 0x4 - core index']
  #allocation1 [shape = 'u32[144,128]{1,0:T(1,128)}', space=vmem, size = 0x12000, scoped, tag = 'internal scratch']
  #allocation2 [shape = 'f32[2,256]{1,0:T(2,128)}', space=vmem, size = 0x800, scoped, tag = 'scratch operand']
  %s0 = inlined_call_operand.hbm [shape: bf16[48,128], index: 0, kind: input, shape index: {}]
  %s1 = inlined_call_operand.hbm [shape: bf16[128,640], index: 1, kind: input, shape index: {}]
  %s2 = inlined_call_operand.vmem [shape: f32[1,128], index: 2, kind: input, shape index: {}]
  %s3 = inlined_call_operand.hbm [shape: bf16[48,256], index: 3, kind: output, shape index: {}]
  %s4 = sld [smem:[#allocation0]]
  $region57: #{tpu_custom_call.1} parent=0
    _
  %s6 = ssub.s32 1, %s4
  %s7 = scalar_select 0, %s6, %s4
  $region1: #{tpu_custom_call.1} parent=0
    #allocation3 [shape = 'u8[4096]{0}', space=vmem, size = 0x1000, scoped, tag = 'input window, operand 0']
    #allocation4 [shape = 's32[2]{0}', space=sflag, size = 0x8, scoped, tag = 'scoped memory for tpu_custom_call.1']
    #allocation5 [shape = 's32[2]{0}', space=sflag, size = 0x8, scoped, tag = 'scoped memory for tpu_custom_call.1']
    #allocation6 [shape = 'u8[163840]{0}', space=vmem, size = 0x28000, scoped, tag = 'input window, operand 1, single buffered']
    #allocation7 [shape = 's32[1]{0}', space=sflag, size = 0x4, scoped, tag = 'scoped memory for tpu_custom_call.1']
    #allocation8 [shape = 'u8[8192]{0}', space=vmem, size = 0x2000, scoped, tag = 'output window, operand 0']
    %8 = vsyncpa [#allocation4], 0
    %s9 = scalar_lea.sflag [#allocation4], 1
    %10 = vsyncpa %s9, 0
    %11 = vsyncpa [#allocation7], 0
    %12 = vsyncpa [#allocation5], 0
    %s13 = scalar_lea.sflag [#allocation5], 1
    %14 = vsyncpa %s13, 0
    loop: start=0, step=1, limit=8
    $region2: #{tpu_custom_call.1} parent=1 // loop_pre_header
      _
    $region3: #{tpu_custom_call.1} parent=1 // loop_header
      %s16 = sphi 0, %s20
      %p17 = scmp.ge.s32.totalorder %s16, 8
      %s23 = sphi 0, %s35
      %s24 = sphi 0, %s31
      %s25 = sphi 0, %s23
      %s26 = sphi 0, %s24
      %s27 = sphi 0, %s25
      %s28 = sphi 0, %s26
      %s42 = sphi 0, %s44
      %s45 = sphi 0, %s42
      %s46 = sphi 0, %s45
      %s62 = sphi 0, %s46
      %s66 = sphi 0, %s66
      %s68 = sphi 0, %s66
      %s69 = sphi 0, %s68
      %s83 = sphi 0, %s69
      %s87 = sphi 0, %s87
      %s89 = sphi 0, %s87
      %s90 = sphi 0, %s89
      %s104 = sphi 0, %s90
      %s114 = sphi 0, %s116
      %s117 = sphi 0, %s114
      %s118 = sphi 0, %s117
      %s134 = sphi 0, %s118
    $region4: #{tpu_custom_call.1} parent=1 // loop_header_branch
      %19 = sbr.rel (%p17) target = $region8
    $region5: #{tpu_custom_call.1} parent=1 // loop_body
      %s21 = ssub.s32 %s16, 1
      %s22 = ssub.s32 %s16, 2
      %s29 = sadd.s32 1, %s24
      %p30 = scmp.ge.s32.totalorder %s29, 3
      %s31 = scalar_select %p30, 0, %s29
      %s32 = sadd.s32 1, %s23
      %s33 = scalar_select %p30, %s32, %s23
      %p34 = scmp.ge.s32.totalorder %s33, 2
      %s35 = scalar_select %p34, 0, %s33
      %s36 = smul.u32 %s23, 3
      %s37 = sadd.s32 %s36, %s24
      %s38 = smul.u32 %s35, 3
      %s39 = sadd.s32 %s38, %s31
      %s40 = ssub.s32 %s37, %s39
      %p41 = scmp.eq.s32.totalorder %s40, 0
      %s43 = sadd.s32 %s42, 1
      %s44 = scalar_select %p41, %s42, %s43
      %p47 = pneg %p41
      %p48 = scmp.eq.s32.totalorder %s16, 5
      %p49 = por %p47, %p48
      %p50 = scmp.ne.s32.totalorder %s42, %s45
      %p51 = scmp.eq.s32.totalorder %s16, 0
      %p52 = por %p50, %p51
      %p53 = scmp.ne.s32.totalorder %s42, %s45
      %p54 = scmp.eq.s32.totalorder %s21, 5
      %p55 = por %p53, %p54
      %p56 = scmp.ne.s32.totalorder %s45, %s46
      %p57 = scmp.eq.s32.totalorder %s21, 0
      %p58 = por %p56, %p57
      %p59 = scmp.ne.s32.totalorder %s45, %s46
      %p60 = scmp.eq.s32.totalorder %s22, 5
      %p61 = por %p59, %p60
      %p63 = scmp.ne.s32.totalorder %s46, %s62
      %p64 = scmp.eq.s32.totalorder %s22, 0
      %p65 = por %p63, %p64
      %s67 = sadd.s32 %s66, 1
      %p70 = scmp.eq.s32.totalorder %s16, 5
      %p71 = scmp.ne.s32.totalorder %s66, %s68
      %p72 = scmp.eq.s32.totalorder %s16, 0
      %p73 = por %p71, %p72
      %p74 = scmp.ne.s32.totalorder %s66, %s68
      %p75 = scmp.eq.s32.totalorder %s21, 5
      %p76 = por %p74, %p75
      %p77 = scmp.ne.s32.totalorder %s68, %s69
      %p78 = scmp.eq.s32.totalorder %s21, 0
      %p79 = por %p77, %p78
      %p80 = scmp.ne.s32.totalorder %s68, %s69
      %p81 = scmp.eq.s32.totalorder %s22, 5
      %p82 = por %p80, %p81
      %p84 = scmp.ne.s32.totalorder %s69, %s83
      %p85 = scmp.eq.s32.totalorder %s22, 0
      %p86 = por %p84, %p85
      %s88 = sadd.s32 %s87, 1
      %p91 = scmp.eq.s32.totalorder %s16, 5
      %p92 = scmp.ne.s32.totalorder %s87, %s89
      %p93 = scmp.eq.s32.totalorder %s16, 0
      %p94 = por %p92, %p93
      %p95 = scmp.ne.s32.totalorder %s87, %s89
      %p96 = scmp.eq.s32.totalorder %s21, 5
      %p97 = por %p95, %p96
      %p98 = scmp.ne.s32.totalorder %s89, %s90
      %p99 = scmp.eq.s32.totalorder %s21, 0
      %p100 = por %p98, %p99
      %p101 = scmp.ne.s32.totalorder %s89, %s90
      %p102 = scmp.eq.s32.totalorder %s22, 5
      %p103 = por %p101, %p102
      %p105 = scmp.ne.s32.totalorder %s90, %s104
      %p106 = scmp.eq.s32.totalorder %s22, 0
      %p107 = por %p105, %p106
      %s108 = smul.u32 %s23, 3
      %s109 = sadd.s32 %s108, %s24
      %s110 = smul.u32 %s35, 3
      %s111 = sadd.s32 %s110, %s31
      %s112 = ssub.s32 %s109, %s111
      %p113 = scmp.eq.s32.totalorder %s112, 0
      %s115 = sadd.s32 %s114, 1
      %s116 = scalar_select %p113, %s114, %s115
      %p119 = pneg %p113
      %p120 = scmp.eq.s32.totalorder %s16, 5
      %p121 = por %p119, %p120
      %p122 = scmp.ne.s32.totalorder %s114, %s117
      %p123 = scmp.eq.s32.totalorder %s16, 0
      %p124 = por %p122, %p123
      %p125 = scmp.ne.s32.totalorder %s114, %s117
      %p126 = scmp.eq.s32.totalorder %s21, 5
      %p127 = por %p125, %p126
      %p128 = scmp.ne.s32.totalorder %s117, %s118
      %p129 = scmp.eq.s32.totalorder %s21, 0
      %p130 = por %p128, %p129
      %p131 = scmp.ne.s32.totalorder %s117, %s118
      %p132 = scmp.eq.s32.totalorder %s22, 5
      %p133 = por %p131, %p132
      %p135 = scmp.ne.s32.totalorder %s118, %s134
      %p136 = scmp.eq.s32.totalorder %s22, 0
      %p137 = por %p135, %p136
      %p138 = scmp.le.s32.totalorder 1, %s16
      %p139 = scmp.lt.s32.totalorder %s16, 7
      %p140 = pnand %p138, %p139
      %p141 = pneg %p140
      // Predicated region
      $region9: #{tpu_custom_call.1} parent=5 // pred_check
        _
      $region10: #{tpu_custom_call.1} parent=5 // pred_check_branch
        %143 = sbr.rel (%p140) target = $region12
      $region11: #{tpu_custom_call.1} parent=5 // pred_region
        %s144 = ssub.s32 %s16, 1
        // Predicated region
        $region13: #{tpu_custom_call.1} parent=11 // pred_check
          %p145 = pneg %p79
        $region14: #{tpu_custom_call.1} parent=11 // pred_check_branch
          %147 = sbr.rel (%p145) target = $region16
        $region15: #{tpu_custom_call.1} parent=11 // pred_region
          %s149 = ssub.s32 5120, 5120
          %150 = vsyncadd [#allocation7], %s149
          %s151 = sshll.u32 [#allocation6], 4
          %s152 = int_to_ptr.vmem [resolvable:$true] %s151
          %157 = dma.hbm_to_vmem [thread:$0]  %s1, 5120, %s152, [#allocation7], 320, 320, 20
        $region16: #{tpu_custom_call.1} parent=11 // pred_fallthru
          _
        // Predicated region
        $region17: #{tpu_custom_call.1} parent=11 // pred_check
          %p158 = pneg %p100
        $region18: #{tpu_custom_call.1} parent=11 // pred_check_branch
          %160 = sbr.rel (%p158) target = $region20
        $region19: #{tpu_custom_call.1} parent=11 // pred_region
          _
        $region20: #{tpu_custom_call.1} parent=11 // pred_fallthru
          _
      $region12: #{tpu_custom_call.1} parent=5 // pred_fallthru
        _
      %p161 = scmp.lt.s32.totalorder %s16, 6
      // Predicated region
      $region21: #{tpu_custom_call.1} parent=5 // pred_check
        %p162 = pneg %p161
      $region22: #{tpu_custom_call.1} parent=5 // pred_check_branch
        %164 = sbr.rel (%p162) target = $region24
      $region23: #{tpu_custom_call.1} parent=5 // pred_region
        // Predicated region
        $region25: #{tpu_custom_call.1} parent=23 // pred_check
          %p165 = pneg %p52
        $region26: #{tpu_custom_call.1} parent=23 // pred_check_branch
          %167 = sbr.rel (%p165) target = $region28
        $region27: #{tpu_custom_call.1} parent=23 // pred_region
          %s168 = sand.u32 %s42, 1
          %s169 = scalar_lea.sflag [#allocation4], %s168
          %s170 = sand.u32 %s42, 1
          %s171 = smul.addr %s170, 4
          %s172 = scalar_lea.vmem [#allocation3], %s171
          %s173 = smul.u32 %s23, 3
          %s174 = sadd.s32 %s173, %s24
          %s176 = ssub.s32 64, 64
          %177 = vsyncadd %s169, %s176
          %s178 = smul.addr %s174, 64
          %s179 = scalar_lea.hbm %s0, %s178
          %s181 = sshll.u32 %s172, 4
          %s182 = int_to_ptr.vmem [resolvable:$true] %s181
          %184 = dma.hbm_to_vmem [thread:$0]  %s179, 64, %s182, %s169
        $region28: #{tpu_custom_call.1} parent=23 // pred_fallthru
          _
      $region24: #{tpu_custom_call.1} parent=5 // pred_fallthru
        _
      %p185 = scmp.le.s32.totalorder 1, %s16
      %p186 = scmp.lt.s32.totalorder %s16, 7
      %p187 = pnand %p185, %p186
      %p188 = pneg %p187
      // Predicated region
      $region29: #{tpu_custom_call.1} parent=5 // pred_check
        _
      $region30: #{tpu_custom_call.1} parent=5 // pred_check_branch
        %190 = sbr.rel (%p187) target = $region32
      $region31: #{tpu_custom_call.1} parent=5 // pred_region
        %s191 = ssub.s32 %s16, 1
        %s192 = sand.u32 %s45, 1
        %s193 = scalar_lea.sflag [#allocation4], %s192
        %s194 = sand.u32 %s45, 1
        %s195 = smul.addr %s194, 4
        %s196 = scalar_lea.vmem [#allocation3], %s195
        // Predicated region
        $region33: #{tpu_custom_call.1} parent=31 // pred_check
          %p197 = pneg %p58
        $region34: #{tpu_custom_call.1} parent=31 // pred_check_branch
          %199 = sbr.rel (%p197) target = $region36
        $region35: #{tpu_custom_call.1} parent=31 // pred_region
          %200 = dma.done %s193, 64
        $region36: #{tpu_custom_call.1} parent=31 // pred_fallthru
          _
        // Predicated region
        $region37: #{tpu_custom_call.1} parent=31 // pred_check
          %p201 = pneg %p79
        $region38: #{tpu_custom_call.1} parent=31 // pred_check_branch
          %203 = sbr.rel (%p201) target = $region40
        $region39: #{tpu_custom_call.1} parent=31 // pred_region
          %204 = dma.done [#allocation7], 5120
        $region40: #{tpu_custom_call.1} parent=31 // pred_fallthru
          _
        %s205 = sand.u32 %s45, 1
        %s206 = scalar_lea.sflag [#allocation4], %s205
        %s207 = sand.u32 %s45, 1
        %s208 = smul.addr %s207, 4
        %s209 = scalar_lea.vmem [#allocation3], %s208
        %p210 = pneg %p58
        %p211 = pneg %p55
        %p212 = pneg %p79
        %p213 = pneg %p76
        %p214 = pneg %p100
        %p215 = pneg %p97
        %p216 = pneg %p130
        %p217 = pneg %p127
        %s218 = sand.u32 %s117, 1
        %s219 = scalar_lea.sflag [#allocation5], %s218
        %s220 = sand.u32 %s117, 1
        %s221 = smul.addr %s220, 8
        %s222 = scalar_lea.vmem [#allocation8], %s221
        %s223 = smul.u32 %s25, 3
        %s224 = sadd.s32 %s223, %s26
        %s225 = smul.u32 %s25, 3
        %s226 = sadd.s32 %s225, %s26
        %v228 = vld [vmem:[%s196] sm:$0xf]
        %v229 = vld [vmem:[#allocation6] sm:$0xff]
        %v230 = vld [vmem:[#allocation6 + $0x8] sm:$0xff]
        %v231 = vld [vmem:[#allocation6 + $0x10] sm:$0xf]
        %v232 = vld [vmem:[#allocation6 + $0x14] sm:$0xff]
        %v233 = vld [vmem:[#allocation6 + $0x1c] sm:$0xff]
        %v234 = vld [vmem:[#allocation6 + $0x24] sm:$0xf]
        %v235 = vld [vmem:[#allocation6 + $0x28] sm:$0xff]
        %v236 = vld [vmem:[#allocation6 + $0x30] sm:$0xff]
        %v237 = vld [vmem:[#allocation6 + $0x38] sm:$0xf]
        %v238 = vld [vmem:[#allocation6 + $0x3c] sm:$0xff]
        %v239 = vld [vmem:[#allocation6 + $0x44] sm:$0xff]
        %v240 = vld [vmem:[#allocation6 + $0x4c] sm:$0xf]
        %v241 = vld [vmem:[#allocation6 + $0x50] sm:$0xff]
        %v242 = vld [vmem:[#allocation6 + $0x58] sm:$0xff]
        %v243 = vld [vmem:[#allocation6 + $0x60] sm:$0xf]
        %v244 = vld [vmem:[#allocation6 + $0x64] sm:$0xff]
        %v245 = vld [vmem:[#allocation6 + $0x6c] sm:$0xff]
        %v246 = vld [vmem:[#allocation6 + $0x74] sm:$0xf]
        %v247 = vld [vmem:[#allocation6 + $0x78] sm:$0xff]
        %v248 = vld [vmem:[#allocation6 + $0x80] sm:$0xff]
        %v249 = vld [vmem:[#allocation6 + $0x88] sm:$0xf]
        %v250 = vld [vmem:[#allocation6 + $0x8c] sm:$0xff]
        %v251 = vld [vmem:[#allocation6 + $0x94] sm:$0xff]
        %v252 = vld [vmem:[#allocation6 + $0x9c] sm:$0xf]
        %v253 = vld [vmem:[#allocation6 + $0xa0] sm:$0xff]
        %v254 = vld [vmem:[#allocation6 + $0xa8] sm:$0xff]
        %v255 = vld [vmem:[#allocation6 + $0xb0] sm:$0xf]
        %v256 = vld [vmem:[#allocation6 + $0xb4] sm:$0xff]
        %v257 = vld [vmem:[#allocation6 + $0xbc] sm:$0xff]
        %v258 = vld [vmem:[#allocation6 + $0xc4] sm:$0xf]
        %v259 = vld [vmem:[#allocation6 + $0xc8] sm:$0xff]
        %v260 = vld [vmem:[#allocation6 + $0xd0] sm:$0xff]
        %v261 = vld [vmem:[#allocation6 + $0xd8] sm:$0xf]
        %v262 = vld [vmem:[#allocation6 + $0xdc] sm:$0xff]
        %v263 = vld [vmem:[#allocation6 + $0xe4] sm:$0xff]
        %v264 = vld [vmem:[#allocation6 + $0xec] sm:$0xf]
        %v265 = vld [vmem:[#allocation6 + $0xf0] sm:$0xff]
        %v266 = vld [vmem:[#allocation6 + $0xf8] sm:$0xff]
        %v267 = vld [vmem:[#allocation6 + $0x100] sm:$0xf]
        %v268 = vld [vmem:[#allocation6 + $0x104] sm:$0xff]
        %v269 = vld [vmem:[#allocation6 + $0x10c] sm:$0xff]
        %v270 = vld [vmem:[#allocation6 + $0x114] sm:$0xf]
        %v271 = vld [vmem:[#allocation6 + $0x118] sm:$0xff]
        %v272 = vld [vmem:[#allocation6 + $0x120] sm:$0xff]
        %v273 = vld [vmem:[#allocation6 + $0x128] sm:$0xf]
        %v274 = vld [vmem:[#allocation6 + $0x12c] sm:$0xff]
        %v275 = vld [vmem:[#allocation6 + $0x134] sm:$0xff]
        %v276 = vld [vmem:[#allocation6 + $0x13c] sm:$0xf]
        %v325 = vunpack.c.l.b16 %v229
        %v326 = vunpack.c.h.b16 %v229
        %v327 = vunpack.c.l.b16 %v230
        %v328 = vunpack.c.h.b16 %v230
        %v329 = vunpack.c.l.b16 %v231
        %v330 = vunpack.c.l.b16 %v232
        %v331 = vunpack.c.h.b16 %v232
        %v332 = vunpack.c.l.b16 %v233
        %v333 = vunpack.c.h.b16 %v233
        %v334 = vunpack.c.l.b16 %v234
        %v335 = vunpack.c.l.b16 %v235
        %v336 = vunpack.c.h.b16 %v235
        %v337 = vunpack.c.l.b16 %v236
        %v338 = vunpack.c.h.b16 %v236
        %v339 = vunpack.c.l.b16 %v237
        %v340 = vunpack.c.l.b16 %v238
        %v341 = vunpack.c.h.b16 %v238
        %v342 = vunpack.c.l.b16 %v239
        %v343 = vunpack.c.h.b16 %v239
        %v344 = vunpack.c.l.b16 %v240
        %v345 = vunpack.c.l.b16 %v241
        %v346 = vunpack.c.h.b16 %v241
        %v347 = vunpack.c.l.b16 %v242
        %v348 = vunpack.c.h.b16 %v242
        %v349 = vunpack.c.l.b16 %v243
        %v350 = vunpack.c.l.b16 %v244
        %v351 = vunpack.c.h.b16 %v244
        %v352 = vunpack.c.l.b16 %v245
        %v353 = vunpack.c.h.b16 %v245
        %v354 = vunpack.c.l.b16 %v246
        %v355 = vunpack.c.l.b16 %v247
        %v356 = vunpack.c.h.b16 %v247
        %v357 = vunpack.c.l.b16 %v248
        %v358 = vunpack.c.h.b16 %v248
        %v359 = vunpack.c.l.b16 %v249
        %v360 = vunpack.c.l.b16 %v250
        %v361 = vunpack.c.h.b16 %v250
        %v362 = vunpack.c.l.b16 %v251
        %v363 = vunpack.c.h.b16 %v251
        %v364 = vunpack.c.l.b16 %v252
        %v365 = vunpack.c.l.b16 %v253
        %v366 = vunpack.c.h.b16 %v253
        %v367 = vunpack.c.l.b16 %v254
        %v368 = vunpack.c.h.b16 %v254
        %v369 = vunpack.c.l.b16 %v255
        %v370 = vunpack.c.l.b16 %v256
        %v371 = vunpack.c.h.b16 %v256
        %v372 = vunpack.c.l.b16 %v257
        %v373 = vunpack.c.h.b16 %v257
        %v374 = vunpack.c.l.b16 %v258
        %v375 = vunpack.c.l.b16 %v259
        %v376 = vunpack.c.h.b16 %v259
        %v377 = vunpack.c.l.b16 %v260
        %v378 = vunpack.c.h.b16 %v260
        %v379 = vunpack.c.l.b16 %v261
        %v380 = vunpack.c.l.b16 %v262
        %v381 = vunpack.c.h.b16 %v262
        %v382 = vunpack.c.l.b16 %v263
        %v383 = vunpack.c.h.b16 %v263
        %v384 = vunpack.c.l.b16 %v264
        %v385 = vunpack.c.l.b16 %v265
        %v386 = vunpack.c.h.b16 %v265
        %v387 = vunpack.c.l.b16 %v266
        %v388 = vunpack.c.h.b16 %v266
        %v389 = vunpack.c.l.b16 %v267
        %v390 = vunpack.c.l.b16 %v268
        %v391 = vunpack.c.h.b16 %v268
        %v392 = vunpack.c.l.b16 %v269
        %v393 = vunpack.c.h.b16 %v269
        %v394 = vunpack.c.l.b16 %v270
        %v395 = vunpack.c.l.b16 %v271
        %v396 = vunpack.c.h.b16 %v271
        %v397 = vunpack.c.l.b16 %v272
        %v398 = vunpack.c.h.b16 %v272
        %v399 = vunpack.c.l.b16 %v273
        %v400 = vunpack.c.l.b16 %v274
        %v401 = vunpack.c.h.b16 %v274
        %v402 = vunpack.c.l.b16 %v275
        %v403 = vunpack.c.h.b16 %v275
        %v404 = vunpack.c.l.b16 %v276
        %v405 = vpack.c.b16 %v330, %v325
        %v406 = vpack.c.b16 %v331, %v326
        %v407 = vpack.c.b16 %v332, %v327
        %v408 = vpack.c.b16 %v333, %v328
        %v409 = vpack.c.b16 %v334, %v329
        %v410 = vpack.c.b16 %v340, %v335
        %v411 = vpack.c.b16 %v341, %v336
        %v412 = vpack.c.b16 %v342, %v337
        %v413 = vpack.c.b16 %v343, %v338
        %v414 = vpack.c.b16 %v344, %v339
        %v415 = vpack.c.b16 %v350, %v345
        %v416 = vpack.c.b16 %v351, %v346
        %v417 = vpack.c.b16 %v352, %v347
        %v418 = vpack.c.b16 %v353, %v348
        %v419 = vpack.c.b16 %v354, %v349
        %v420 = vpack.c.b16 %v360, %v355
        %v421 = vpack.c.b16 %v361, %v356
        %v422 = vpack.c.b16 %v362, %v357
        %v423 = vpack.c.b16 %v363, %v358
        %v424 = vpack.c.b16 %v364, %v359
        %v425 = vpack.c.b16 %v370, %v365
        %v426 = vpack.c.b16 %v371, %v366
        %v427 = vpack.c.b16 %v372, %v367
        %v428 = vpack.c.b16 %v373, %v368
        %v429 = vpack.c.b16 %v374, %v369
        %v430 = vpack.c.b16 %v380, %v375
        %v431 = vpack.c.b16 %v381, %v376
        %v432 = vpack.c.b16 %v382, %v377
        %v433 = vpack.c.b16 %v383, %v378
        %v434 = vpack.c.b16 %v384, %v379
        %v435 = vpack.c.b16 %v390, %v385
        %v436 = vpack.c.b16 %v391, %v386
        %v437 = vpack.c.b16 %v392, %v387
        %v438 = vpack.c.b16 %v393, %v388
        %v439 = vpack.c.b16 %v394, %v389
        %v440 = vpack.c.b16 %v400, %v395
        %v441 = vpack.c.b16 %v401, %v396
        %v442 = vpack.c.b16 %v402, %v397
        %v443 = vpack.c.b16 %v403, %v398
        %v444 = vpack.c.b16 %v404, %v399
        %485 = vmatprep.subr.bf16.mxu0 %v441
        %486 = vmatpush1.bf16.msra.mxu0 %v440
        %487 = vmatprep.subr.bf16.mxu0 %v436
        %488 = vmatpush1.bf16.msra.mxu0 %v435
        %489 = vmatprep.subr.bf16.mxu0 %v431
        %490 = vmatpush1.bf16.msra.mxu0 %v430
        %491 = vmatprep.subr.bf16.mxu0 %v426
        %492 = vmatpush1.bf16.msra.mxu0 %v425
        %493 = vmatprep.subr.bf16.mxu0 %v421
        %494 = vmatpush1.bf16.msra.mxu0 %v420
        %495 = vmatprep.subr.bf16.mxu0 %v416
        %496 = vmatpush1.bf16.msra.mxu0 %v415
        %497 = vmatprep.subr.bf16.mxu0 %v411
        %498 = vmatpush1.bf16.msra.mxu0 %v410
        %499 = vmatprep.subr.bf16.mxu0 %v406
        %500 = vmatpush1.bf16.msra.mxu0 %v405
        %501 = vmatprep.subr.bf16.mxu0 0
        %502 = vmatpush2.bf16.msra.mxu0 0
        %503 = vmatprep.subr.bf16.mxu0 0
        %504 = vmatpush2.bf16.msra.mxu0 0
        %505 = vmatprep.subr.bf16.mxu0 0
        %506 = vmatpush2.bf16.msra.mxu0 0
        %507 = vmatprep.subr.bf16.mxu0 0
        %508 = vmatpush2.bf16.msra.mxu0 0
        %509 = vmatprep.subr.bf16.mxu0 0
        %510 = vmatpush2.bf16.msra.mxu0 0
        %511 = vmatprep.subr.bf16.mxu0 0
        %512 = vmatpush2.bf16.msra.mxu0 0
        %513 = vmatprep.subr.bf16.mxu0 0
        %514 = vmatpush2.bf16.msra.mxu0 0
        %515 = vmatprep.subr.bf16.mxu0 0
        %516 = vmatpush2.bf16.msra.mxu0 0
        %517 = vmatprep.mubr.bf16.mxu0 0
        %518 = vmatmul.mubr.bf16.gmra.mxu0 %v228
        %v519 = vpop.f32.mrf.mxu0
        %v520 = vadd.f32 0.0, %v519
        %v521 = vpop.f32.mrf.mxu0
        %v522 = vadd.f32 0.0, %v521
        %v523 = vpop.f32.mrf.mxu0
        %v524 = vpop.f32.mrf.mxu0
        %525 = vdwg.mxu0
        %526 = vmatprep.subr.bf16.mxu0 %v443
        %527 = vmatpush1.bf16.msra.mxu0 %v442
        %528 = vmatprep.subr.bf16.mxu0 %v438
        %529 = vmatpush1.bf16.msra.mxu0 %v437
        %530 = vmatprep.subr.bf16.mxu0 %v433
        %531 = vmatpush1.bf16.msra.mxu0 %v432
        %532 = vmatprep.subr.bf16.mxu0 %v428
        %533 = vmatpush1.bf16.msra.mxu0 %v427
        %534 = vmatprep.subr.bf16.mxu0 %v423
        %535 = vmatpush1.bf16.msra.mxu0 %v422
        %536 = vmatprep.subr.bf16.mxu0 %v418
        %537 = vmatpush1.bf16.msra.mxu0 %v417
        %538 = vmatprep.subr.bf16.mxu0 %v413
        %539 = vmatpush1.bf16.msra.mxu0 %v412
        %540 = vmatprep.subr.bf16.mxu0 %v408
        %541 = vmatpush1.bf16.msra.mxu0 %v407
        %542 = vmatprep.subr.bf16.mxu0 0
        %543 = vmatpush2.bf16.msra.mxu0 0
        %544 = vmatprep.subr.bf16.mxu0 0
        %545 = vmatpush2.bf16.msra.mxu0 0
        %546 = vmatprep.subr.bf16.mxu0 0
        %547 = vmatpush2.bf16.msra.mxu0 0
        %548 = vmatprep.subr.bf16.mxu0 0
        %549 = vmatpush2.bf16.msra.mxu0 0
        %550 = vmatprep.subr.bf16.mxu0 0
        %551 = vmatpush2.bf16.msra.mxu0 0
        %552 = vmatprep.subr.bf16.mxu0 0
        %553 = vmatpush2.bf16.msra.mxu0 0
        %554 = vmatprep.subr.bf16.mxu0 0
        %555 = vmatpush2.bf16.msra.mxu0 0
        %556 = vmatprep.subr.bf16.mxu0 0
        %557 = vmatpush2.bf16.msra.mxu0 0
        %558 = vmatprep.mubr.bf16.mxu0 0
        %559 = vmatmul.mubr.bf16.gmra.mxu0 %v228
        %v560 = vpop.f32.mrf.mxu0
        %v561 = vadd.f32 0.0, %v560
        %v562 = vpop.f32.mrf.mxu0
        %v563 = vadd.f32 0.0, %v562
        %v564 = vpop.f32.mrf.mxu0
        %v565 = vpop.f32.mrf.mxu0
        %566 = vdwg.mxu0
        %567 = vmatprep.subr.bf16.mxu0 0
        %568 = vmatpush1.bf16.msra.mxu0 %v444
        %569 = vmatprep.subr.bf16.mxu0 0
        %570 = vmatpush1.bf16.msra.mxu0 %v439
        %571 = vmatprep.subr.bf16.mxu0 0
        %572 = vmatpush1.bf16.msra.mxu0 %v434
        %573 = vmatprep.subr.bf16.mxu0 0
        %574 = vmatpush1.bf16.msra.mxu0 %v429
        %575 = vmatprep.subr.bf16.mxu0 0
        %576 = vmatpush1.bf16.msra.mxu0 %v424
        %577 = vmatprep.subr.bf16.mxu0 0
        %578 = vmatpush1.bf16.msra.mxu0 %v419
        %579 = vmatprep.subr.bf16.mxu0 0
        %580 = vmatpush1.bf16.msra.mxu0 %v414
        %581 = vmatprep.subr.bf16.mxu0 0
        %582 = vmatpush1.bf16.msra.mxu0 %v409
        %583 = vmatprep.subr.bf16.mxu0 0
        %584 = vmatpush2.bf16.msra.mxu0 0
        %585 = vmatprep.subr.bf16.mxu0 0
        %586 = vmatpush2.bf16.msra.mxu0 0
        %587 = vmatprep.subr.bf16.mxu0 0
        %588 = vmatpush2.bf16.msra.mxu0 0
        %589 = vmatprep.subr.bf16.mxu0 0
        %590 = vmatpush2.bf16.msra.mxu0 0
        %591 = vmatprep.subr.bf16.mxu0 0
        %592 = vmatpush2.bf16.msra.mxu0 0
        %593 = vmatprep.subr.bf16.mxu0 0
        %594 = vmatpush2.bf16.msra.mxu0 0
        %595 = vmatprep.subr.bf16.mxu0 0
        %596 = vmatpush2.bf16.msra.mxu0 0
        %597 = vmatprep.subr.bf16.mxu0 0
        %598 = vmatpush2.bf16.msra.mxu0 0
        %599 = vmatprep.mubr.bf16.mxu0 0
        %600 = vmatmul.mubr.bf16.gmra.mxu0 %v228
        %v601 = vpop.f32.mrf.mxu0
        %v602 = vadd.f32 0.0, %v601
        %v603 = vpop.f32.mrf.mxu0
        %v604 = vpop.f32.mrf.mxu0
        %v605 = vpop.f32.mrf.mxu0
        %606 = vdwg.mxu0
        %v607 = vld [vmem:[%s2] sm:$0x1]
        %p608 = scmp.eq.s32.totalorder %s26, 0
        // Predicated region
        $region41: #{tpu_custom_call.1} parent=31 // pred_check
          %p609 = pneg %p608
        $region42: #{tpu_custom_call.1} parent=31 // pred_check_branch
          %611 = sbr.rel (%p609) target = $region44
        $region43: #{tpu_custom_call.1} parent=31 // pred_region
          %612 = vst [vmem:[#allocation2] sm:$0xf] 0.0
        $region44: #{tpu_custom_call.1} parent=31 // pred_fallthru
          _
        %v613 = vld [vmem:[#allocation2] sm:$0xf]
        %v615 = vrot.slane %v561, 7
        %vm617 = vcmask 1040384
        %v618 = vsel %vm617, 0.0, %v615
        %v619 = vsel %vm617, %v615, 0.0
        %v620 = vadd.f32 %v520, %v618
        %v621 = vadd.f32 %v619, 0.0
        %v623 = vrot.slane %v602, 6
        %vm625 = vcmask 1041408
        %v626 = vsel %vm625, 0.0, %v623
        %v627 = vadd.f32 %v620, %v626
        %v628 = vadd.f32 %v621, %v623
        %629 = vst [vmem:[#allocation2] sm:$0x3] %v628
        %v630 = vsel %vm625, %v613, 0.0
        %v631 = vadd.f32 %v627, %v630
        %v633 = vlaneseq
        %v634 = vshrl.u32 %v633, 7
        %v635 = vsub.s32 0, %v634
        %v636 = vrot.slane %v607, %v635
        %v638 = vadd.f32 %v631, %v636
        %v639 = vmax.f32 %v638, 0.0
        %v640 = vpack.c.bf16 %v639, %v639
        %641 = vst [vmem:[%s222] sm:$0xf] %v640
        %v643 = vrot.slane %v563, 7
        %v645 = vsel %vm617, 0.0, %v643
        %v646 = vsel %vm617, %v643, 0.0
        %v647 = vadd.f32 %v522, %v645
        %v648 = vadd.f32 %v646, 0.0
        %649 = vst [vmem:[#allocation2 + $0x2] sm:$0x3] %v648
        %v652 = vunpack.c.l.s4 1983009808
        %v653 = vunpack.c.0.s8 %v652
        %v654 = vlaneseq
        %v655 = vshrl.u32 %v654, 7
        %v656 = vsub.s32 %v653, %v655
        %v657 = vrot.slane %v613, %v656
        %v658 = vcombine.high %v657, %v657
        %v660 = vsel %vm625, %v658, 0.0
        %v661 = vadd.f32 %v647, %v660
        %v662 = vadd.f32 %v661, %v636
        %v663 = vmax.f32 %v662, 0.0
        %v664 = vpack.c.bf16 %v663, %v663
        %665 = vst [vmem:[%s222 + $0x4] sm:$0xf] %v664
        %s666 = sand.u32 %s117, 1
        %s667 = scalar_lea.sflag [#allocation5], %s666
        %s668 = sand.u32 %s117, 1
        %s669 = smul.addr %s668, 8
        %s670 = scalar_lea.vmem [#allocation8], %s669
        // Predicated region
        $region45: #{tpu_custom_call.1} parent=31 // pred_check
          %p671 = pneg %p127
        $region46: #{tpu_custom_call.1} parent=31 // pred_check_branch
          %673 = sbr.rel (%p671) target = $region48
        $region47: #{tpu_custom_call.1} parent=31 // pred_region
          %s674 = smul.u32 %s25, 3
          %s675 = sadd.s32 %s674, %s26
          %s677 = ssub.s32 128, 128
          %678 = vsyncadd %s667, %s677
          %s679 = smul.addr %s675, 2
          %s680 = smul.addr %s679, 64
          %s681 = scalar_lea.hbm %s3, %s680
          %s683 = sshll.u32 %s670, 4
          %s684 = int_to_ptr.vmem [resolvable:$true] %s683
          %686 = dma.vmem_to_hbm [thread:$0]  %s684, 128, %s681, %s667
        $region48: #{tpu_custom_call.1} parent=31 // pred_fallthru
          _
      $region32: #{tpu_custom_call.1} parent=5 // pred_fallthru
        _
      %p687 = scmp.le.s32.totalorder 2, %s16
      // Predicated region
      $region49: #{tpu_custom_call.1} parent=5 // pred_check
        %p688 = pneg %p687
      $region50: #{tpu_custom_call.1} parent=5 // pred_check_branch
        %690 = sbr.rel (%p688) target = $region52
      $region51: #{tpu_custom_call.1} parent=5 // pred_region
        %s691 = ssub.s32 %s16, 2
        // Predicated region
        $region53: #{tpu_custom_call.1} parent=51 // pred_check
          %p692 = pneg %p133
        $region54: #{tpu_custom_call.1} parent=51 // pred_check_branch
          %694 = sbr.rel (%p692) target = $region56
        $region55: #{tpu_custom_call.1} parent=51 // pred_region
          %s695 = sand.u32 %s118, 1
          %s696 = scalar_lea.sflag [#allocation5], %s695
          %s697 = sand.u32 %s118, 1
          %s698 = smul.addr %s697, 8
          %s699 = scalar_lea.vmem [#allocation8], %s698
          %700 = dma.done %s696, 128
        $region56: #{tpu_custom_call.1} parent=51 // pred_fallthru
          _
      $region52: #{tpu_custom_call.1} parent=5 // pred_fallthru
        _
    $region6: #{tpu_custom_call.1} parent=1 // loop_footer
      %s20 = sadd.s32 1, %s16
    $region7: #{tpu_custom_call.1} parent=1 // loop_footer_branch
      %15 = sbr.rel target = $region3
    $region8: #{tpu_custom_call.1} parent=1 // loop_exit
      _
    %701 = vsyncpa [#allocation4], 1
    %s702 = scalar_lea.sflag [#allocation4], 1
    %703 = vsyncpa %s702, 1
    %704 = vsyncpa [#allocation7], 1
    %705 = vsyncpa [#allocation5], 1
    %s706 = scalar_lea.sflag [#allocation5], 1
    %707 = vsyncpa %s706, 1

</llo_original>
